<compile_context>
chip_gen: v5e
topology: v5e:2x2
jax: 0.10.0
libtpu: 0.0.40
codegen_flags: <defaults>
</compile_context>

<pallas_src>
import functools

import jax
import jax.numpy as jnp
from jax import lax
from jax.experimental import pallas as pl
from jax.experimental.pallas import tpu as pltpu

# ---------------- problem sizes (small, consistent with the module) ---------
NO_HEADS = 4
BLOCK_SIZE = 8          # max sequence length (tril size); T == BLOCK_SIZE here
EMBED = 32              # embedding_size (C)
HEAD_SIZE = 8
BATCH = 2
DROPOUT = 0.0           # forward implemented in eval mode (dropout = identity)


def _mha_kernel(x_ref, wk_ref, wv_ref, wl_ref, bl_ref, o_ref,
                *, n_heads, head_size):
    """Single grid step: whole batch, all heads, output linear.

    x_ref : (B, T, C)     VMEM f32   (cast to bf16 in-kernel for the MXU)
    wk_ref: (C, H*hs)     VMEM bf16  fused key/query projection (q == k)
    wv_ref: (C, H*hs)     VMEM bf16  fused value projection
    wl_ref: (H*hs, C)     VMEM bf16  output linear weight (pre-transposed)
    bl_ref: (1, C)        VMEM f32   output linear bias
    o_ref : (B, T, C)     VMEM f32
    """
    batch, seq_len, embed = x_ref.shape
    scale = jnp.float32(head_size ** (-5))        # matches head_size ** (-5)

    # bf16 MXU operand; batch folded into sublanes for the fused projections.
    x = x_ref[...].reshape(batch * seq_len, embed).astype(jnp.bfloat16)

    # Fused projections: one MXU push each (M=B*T, K=C, N=H*hs), f32 accumulate.
    k_all = jnp.dot(x, wk_ref[...], preferred_element_type=jnp.float32)
    v_all = jnp.dot(x, wv_ref[...], preferred_element_type=jnp.float32)

    # Per-batch views: splitting (B*T) -> (B, T) lands exactly on a sublane
    # tile boundary (T == 8), so these reshapes are layout-free.
    k_b = k_all.reshape(batch, seq_len, n_heads * head_size)
    v_b = v_all.reshape(batch, seq_len, n_heads * head_size)
    # q == k in the reference module (self.key called twice). Apply the
    # (power-of-two, hence exact) scale once to q instead of per-head on wei.
    q_b = k_b * scale

    k_mx = k_b.astype(jnp.bfloat16)
    q_mx = q_b.astype(jnp.bfloat16)
    v_mx = v_b.astype(jnp.bfloat16)

    # Plain causal (T, T) mask — no // or %, broadcasts over batch.
    row = lax.broadcasted_iota(jnp.int32, (seq_len, seq_len), 0)
    col = lax.broadcasted_iota(jnp.int32, (seq_len, seq_len), 1)
    keep = col <= row
    neg = jnp.float32(-1e30)   # finite (diagonal always kept) -> no inf/NaN risk

    head_outs = []
    for h in range(n_heads):                       # static, small unrolled loop
        lo = h * head_size
        hi = lo + head_size
        # Batched scores (B, T, T): batch stays a dot_general batch dim, so no
        # cross-batch blocks are computed; MXU consumes k directly (no k.T/XLU).
        wei = jnp.einsum('bqd,bkd->bqk', q_mx[:, :, lo:hi], k_mx[:, :, lo:hi],
                         preferred_element_type=jnp.float32)
        wei = jnp.where(keep, wei, neg)
        # numerically stable softmax in f32
        m = jnp.max(wei, axis=-1, keepdims=True)
        e = jnp.exp(wei - m)
        s = jnp.sum(e, axis=-1, keepdims=True)
        p = e * pl.reciprocal(s, approx=True)      # EUP slot, not a VALU divide
        head_outs.append(
            jnp.einsum('bqk,bkd->bqd', p.astype(jnp.bfloat16), v_mx[:, :, lo:hi],
                       preferred_element_type=jnp.float32))      # (B, T, hs) f32

    # Lane-assemble all heads, then ONE output matmul at contraction depth H*hs.
    cat = jnp.concatenate(head_outs, axis=-1)                     # (B, T, H*hs)
    cat = cat.reshape(batch * seq_len, n_heads * head_size).astype(jnp.bfloat16)
    out = jnp.dot(cat, wl_ref[...], preferred_element_type=jnp.float32)
    out = out + bl_ref[...]                                       # f32 bias add
    o_ref[...] = out.reshape(batch, seq_len, embed).astype(o_ref.dtype)
    # TODO(synk): training-mode dropout (attention probs + output) not implemented;
    # forward matches eval mode / dropout=0.


def prepare_params(wk, wv, wl_t):
    """One-time (init-time) weight prep: fuse heads + cast MXU operands to bf16.

    wk/wv: (H, C, hs) f32  ->  (C, H*hs) bf16
    wl_t : (H*hs, C) f32   ->  (H*hs, C) bf16
    """
    H, C, hs = wk.shape
    wk_f = jnp.transpose(wk, (1, 0, 2)).reshape(C, H * hs).astype(jnp.bfloat16)
    wv_f = jnp.transpose(wv, (1, 0, 2)).reshape(C, H * hs).astype(jnp.bfloat16)
    wl_f = wl_t.astype(jnp.bfloat16)
    return wk_f, wv_f, wl_f


@functools.partial(jax.jit, static_argnames=("n_heads", "head_size"))
def multi_head_attention(x, wk_f, wv_f, wl_f, bl, *,
                         n_heads=NO_HEADS, head_size=HEAD_SIZE):
    """x: (B, T, C) f32; wk_f/wv_f: (C, H*hs) bf16; wl_f: (H*hs, C) bf16; bl: (1, C) f32."""
    B, T, C = x.shape
    kernel = functools.partial(_mha_kernel, n_heads=n_heads, head_size=head_size)
    vmem_spec = pl.BlockSpec(memory_space=pltpu.MemorySpace.VMEM)
    return pl.pallas_call(
        kernel,
        out_shape=jax.ShapeDtypeStruct((B, T, C), x.dtype),
        in_specs=[vmem_spec] * 5,     # whole arrays, VMEM-resident, no pipeline
        out_specs=vmem_spec,
    )(x, wk_f, wv_f, wl_f, bl)


def reference_jax(x, wk, wv, wl_t, bl):
    """Pure-JAX f32 reference mirroring the PyTorch forward (eval mode)."""
    B, T, C = x.shape
    scale = HEAD_SIZE ** (-5)
    keep = jnp.tril(jnp.ones((T, T), dtype=bool))
    outs = []
    for h in range(NO_HEADS):
        k = x @ wk[h]
        v = x @ wv[h]
        wei = (k @ jnp.swapaxes(k, -1, -2)) * scale      # q == k, as in the module
        wei = jnp.where(keep, wei, -jnp.inf)
        wei = jax.nn.softmax(wei, axis=-1)
        outs.append(wei @ v)
    cat = jnp.concatenate(outs, axis=-1)
    return cat @ wl_t + bl


if __name__ == "__main__":
    key = jax.random.PRNGKey(0)
    kx, kk, kv, kw, kb = jax.random.split(key, 5)

    # deterministic "parameters" (PyTorch nn.Linear weights are (out, in);
    # stored pre-transposed as (in, out) so the kernel computes x @ W)
    x = jax.random.normal(kx, (BATCH, BLOCK_SIZE, EMBED), dtype=jnp.float32)
    wk = jax.random.normal(kk, (NO_HEADS, EMBED, HEAD_SIZE), dtype=jnp.float32) * 0.1
    wv = jax.random.normal(kv, (NO_HEADS, EMBED, HEAD_SIZE), dtype=jnp.float32) * 0.1
    wl_t = jax.random.normal(kw, (NO_HEADS * HEAD_SIZE, EMBED), dtype=jnp.float32) * 0.1
    bl = jax.random.normal(kb, (1, EMBED), dtype=jnp.float32) * 0.1

    # one-time, init-time weight fusion + bf16 cast (not part of the per-call path)
    wk_f, wv_f, wl_f = prepare_params(wk, wv, wl_t)
    wk_f, wv_f, wl_f = jax.block_until_ready((wk_f, wv_f, wl_f))

    out = multi_head_attention(x, wk_f, wv_f, wl_f, bl)
    out = jax.block_until_ready(out)

    ref = reference_jax(x, wk, wv, wl_t, bl)
    assert out.shape == (BATCH, BLOCK_SIZE, EMBED)
    # tolerance covers bf16 MXU operands + approximate (EUP) softmax reciprocal
    assert jnp.allclose(out, ref, atol=2e-2, rtol=2e-2), "mismatch vs reference"

    print("KERNEL_OK")
</pallas_src>

<mosaic_0001>
module attributes {stable_mosaic.version = 11 : i64} {
  func.func @_mha_kernel(%arg0: memref<2x8x32xf32, #tpu.memory_space<vmem>>, %arg1: memref<32x32xbf16, #tpu.memory_space<vmem>>, %arg2: memref<32x32xbf16, #tpu.memory_space<vmem>>, %arg3: memref<32x32xbf16, #tpu.memory_space<vmem>>, %arg4: memref<1x32xf32, #tpu.memory_space<vmem>>, %arg5: memref<2x8x32xf32, #tpu.memory_space<vmem>>) attributes {dimension_semantics = [], scalar_prefetch = 0 : i64, scratch_operands = 0 : i64, tpu.core_type = #tpu.core_type<tc>} {
    %c0 = arith.constant 0 : index
    %c0_0 = arith.constant 0 : index
    %c0_1 = arith.constant 0 : index
    %0 = vector.load %arg0[%c0, %c0_0, %c0_1] : memref<2x8x32xf32, #tpu.memory_space<vmem>>, vector<2x8x32xf32>
    %1 = vector.shape_cast %0 : vector<2x8x32xf32> to vector<16x32xf32>
    %2 = arith.truncf %1 : vector<16x32xf32> to vector<16x32xbf16>
    %c0_2 = arith.constant 0 : index
    %c0_3 = arith.constant 0 : index
    %3 = vector.load %arg1[%c0_2, %c0_3] : memref<32x32xbf16, #tpu.memory_space<vmem>>, vector<32x32xbf16>
    %cst = arith.constant dense<0.000000e+00> : vector<16x32xf32>
    %4 = tpu.matmul %2, %3, %cst {dimension_numbers = #tpu.dot_dimension_numbers<[1], [0], [0], [1], [0, 0, 1, 1], [], []>} : vector<16x32xbf16>, vector<32x32xbf16>, vector<16x32xf32> -> vector<16x32xf32>
    %c0_4 = arith.constant 0 : index
    %c0_5 = arith.constant 0 : index
    %5 = vector.load %arg2[%c0_4, %c0_5] : memref<32x32xbf16, #tpu.memory_space<vmem>>, vector<32x32xbf16>
    %cst_6 = arith.constant dense<0.000000e+00> : vector<16x32xf32>
    %6 = tpu.matmul %2, %5, %cst_6 {dimension_numbers = #tpu.dot_dimension_numbers<[1], [0], [0], [1], [0, 0, 1, 1], [], []>} : vector<16x32xbf16>, vector<32x32xbf16>, vector<16x32xf32> -> vector<16x32xf32>
    %7 = vector.shape_cast %4 : vector<16x32xf32> to vector<2x8x32xf32>
    %8 = vector.shape_cast %6 : vector<16x32xf32> to vector<2x8x32xf32>
    %cst_7 = arith.constant 3.05175781E-5 : f32
    %9 = vector.broadcast %cst_7 : f32 to vector<2x8x32xf32>
    %10 = arith.mulf %7, %9 : vector<2x8x32xf32>
    %11 = arith.truncf %7 : vector<2x8x32xf32> to vector<2x8x32xbf16>
    %12 = arith.truncf %10 : vector<2x8x32xf32> to vector<2x8x32xbf16>
    %13 = arith.truncf %8 : vector<2x8x32xf32> to vector<2x8x32xbf16>
    %14 = tpu.iota {dimensions = array<i32: 0>} : vector<8x8xi32>
    %15 = tpu.iota {dimensions = array<i32: 1>} : vector<8x8xi32>
    %16 = arith.cmpi sle, %15, %14 : vector<8x8xi32>
    %17 = vector.extract_strided_slice %12 {offsets = [0, 0, 0], sizes = [2, 8, 8], strides = [1, 1, 1]} : vector<2x8x32xbf16> to vector<2x8x8xbf16>
    %18 = vector.extract_strided_slice %11 {offsets = [0, 0, 0], sizes = [2, 8, 8], strides = [1, 1, 1]} : vector<2x8x32xbf16> to vector<2x8x8xbf16>
    "tpu.trace_start"() <{level = 10 : i32, message = "bqd,bkd->bqk"}> : () -> ()
    %cst_8 = arith.constant dense<0.000000e+00> : vector<2x8x8xf32>
    %19 = tpu.matmul %17, %18, %cst_8 {dimension_numbers = #tpu.dot_dimension_numbers<[2], [2], [1], [1], [0, 0, 0, 1, 1, 1], [0], [0]>} : vector<2x8x8xbf16>, vector<2x8x8xbf16>, vector<2x8x8xf32> -> vector<2x8x8xf32>
    %cst_9 = arith.constant -1.000000e+30 : f32
    "tpu.trace_stop"() : () -> ()
    %20 = vector.shape_cast %16 : vector<8x8xi1> to vector<1x8x8xi1>
    %21 = vector.broadcast %20 : vector<1x8x8xi1> to vector<2x8x8xi1>
    %22 = vector.broadcast %cst_9 : f32 to vector<2x8x8xf32>
    %23 = arith.select %21, %19, %22 : vector<2x8x8xi1>, vector<2x8x8xf32>
    %cst_10 = arith.constant dense<0xFF800000> : vector<2x8xf32>
    %24 = vector.multi_reduction <maximumf>, %23, %cst_10 [2] : vector<2x8x8xf32> to vector<2x8xf32>
    %25 = vector.shape_cast %24 : vector<2x8xf32> to vector<2x8x1xf32>
    %26 = vector.broadcast %25 : vector<2x8x1xf32> to vector<2x8x8xf32>
    %27 = arith.subf %23, %26 : vector<2x8x8xf32>
    %28 = math.exp %27 : vector<2x8x8xf32>
    %cst_11 = arith.constant dense<0.000000e+00> : vector<2x8xf32>
    %29 = vector.multi_reduction <add>, %28, %cst_11 [2] : vector<2x8x8xf32> to vector<2x8xf32>
    %30 = vector.shape_cast %29 : vector<2x8xf32> to vector<2x8x1xf32>
    %31 = tpu.reciprocal %30 {approx = true} : vector<2x8x1xf32> -> vector<2x8x1xf32>
    %32 = vector.broadcast %31 : vector<2x8x1xf32> to vector<2x8x8xf32>
    %33 = arith.mulf %28, %32 : vector<2x8x8xf32>
    %34 = arith.truncf %33 : vector<2x8x8xf32> to vector<2x8x8xbf16>
    %35 = vector.extract_strided_slice %13 {offsets = [0, 0, 0], sizes = [2, 8, 8], strides = [1, 1, 1]} : vector<2x8x32xbf16> to vector<2x8x8xbf16>
    "tpu.trace_start"() <{level = 10 : i32, message = "bqk,bkd->bqd"}> : () -> ()
    %cst_12 = arith.constant dense<0.000000e+00> : vector<2x8x8xf32>
    %36 = tpu.matmul %34, %35, %cst_12 {dimension_numbers = #tpu.dot_dimension_numbers<[2], [1], [1], [2], [0, 0, 0, 1, 1, 2], [0], [0]>} : vector<2x8x8xbf16>, vector<2x8x8xbf16>, vector<2x8x8xf32> -> vector<2x8x8xf32>
    "tpu.trace_stop"() : () -> ()
    %37 = vector.extract_strided_slice %12 {offsets = [0, 0, 8], sizes = [2, 8, 8], strides = [1, 1, 1]} : vector<2x8x32xbf16> to vector<2x8x8xbf16>
    %38 = vector.extract_strided_slice %11 {offsets = [0, 0, 8], sizes = [2, 8, 8], strides = [1, 1, 1]} : vector<2x8x32xbf16> to vector<2x8x8xbf16>
    "tpu.trace_start"() <{level = 10 : i32, message = "bqd,bkd->bqk"}> : () -> ()
    %cst_13 = arith.constant dense<0.000000e+00> : vector<2x8x8xf32>
    %39 = tpu.matmul %37, %38, %cst_13 {dimension_numbers = #tpu.dot_dimension_numbers<[2], [2], [1], [1], [0, 0, 0, 1, 1, 1], [0], [0]>} : vector<2x8x8xbf16>, vector<2x8x8xbf16>, vector<2x8x8xf32> -> vector<2x8x8xf32>
    %cst_14 = arith.constant -1.000000e+30 : f32
    "tpu.trace_stop"() : () -> ()
    %40 = vector.shape_cast %16 : vector<8x8xi1> to vector<1x8x8xi1>
    %41 = vector.broadcast %40 : vector<1x8x8xi1> to vector<2x8x8xi1>
    %42 = vector.broadcast %cst_14 : f32 to vector<2x8x8xf32>
    %43 = arith.select %41, %39, %42 : vector<2x8x8xi1>, vector<2x8x8xf32>
    %cst_15 = arith.constant dense<0xFF800000> : vector<2x8xf32>
    %44 = vector.multi_reduction <maximumf>, %43, %cst_15 [2] : vector<2x8x8xf32> to vector<2x8xf32>
    %45 = vector.shape_cast %44 : vector<2x8xf32> to vector<2x8x1xf32>
    %46 = vector.broadcast %45 : vector<2x8x1xf32> to vector<2x8x8xf32>
    %47 = arith.subf %43, %46 : vector<2x8x8xf32>
    %48 = math.exp %47 : vector<2x8x8xf32>
    %cst_16 = arith.constant dense<0.000000e+00> : vector<2x8xf32>
    %49 = vector.multi_reduction <add>, %48, %cst_16 [2] : vector<2x8x8xf32> to vector<2x8xf32>
    %50 = vector.shape_cast %49 : vector<2x8xf32> to vector<2x8x1xf32>
    %51 = tpu.reciprocal %50 {approx = true} : vector<2x8x1xf32> -> vector<2x8x1xf32>
    %52 = vector.broadcast %51 : vector<2x8x1xf32> to vector<2x8x8xf32>
    %53 = arith.mulf %48, %52 : vector<2x8x8xf32>
    %54 = arith.truncf %53 : vector<2x8x8xf32> to vector<2x8x8xbf16>
    %55 = vector.extract_strided_slice %13 {offsets = [0, 0, 8], sizes = [2, 8, 8], strides = [1, 1, 1]} : vector<2x8x32xbf16> to vector<2x8x8xbf16>
    "tpu.trace_start"() <{level = 10 : i32, message = "bqk,bkd->bqd"}> : () -> ()
    %cst_17 = arith.constant dense<0.000000e+00> : vector<2x8x8xf32>
    %56 = tpu.matmul %54, %55, %cst_17 {dimension_numbers = #tpu.dot_dimension_numbers<[2], [1], [1], [2], [0, 0, 0, 1, 1, 2], [0], [0]>} : vector<2x8x8xbf16>, vector<2x8x8xbf16>, vector<2x8x8xf32> -> vector<2x8x8xf32>
    "tpu.trace_stop"() : () -> ()
    %57 = vector.extract_strided_slice %12 {offsets = [0, 0, 16], sizes = [2, 8, 8], strides = [1, 1, 1]} : vector<2x8x32xbf16> to vector<2x8x8xbf16>
    %58 = vector.extract_strided_slice %11 {offsets = [0, 0, 16], sizes = [2, 8, 8], strides = [1, 1, 1]} : vector<2x8x32xbf16> to vector<2x8x8xbf16>
    "tpu.trace_start"() <{level = 10 : i32, message = "bqd,bkd->bqk"}> : () -> ()
    %cst_18 = arith.constant dense<0.000000e+00> : vector<2x8x8xf32>
    %59 = tpu.matmul %57, %58, %cst_18 {dimension_numbers = #tpu.dot_dimension_numbers<[2], [2], [1], [1], [0, 0, 0, 1, 1, 1], [0], [0]>} : vector<2x8x8xbf16>, vector<2x8x8xbf16>, vector<2x8x8xf32> -> vector<2x8x8xf32>
    %cst_19 = arith.constant -1.000000e+30 : f32
    "tpu.trace_stop"() : () -> ()
    %60 = vector.shape_cast %16 : vector<8x8xi1> to vector<1x8x8xi1>
    %61 = vector.broadcast %60 : vector<1x8x8xi1> to vector<2x8x8xi1>
    %62 = vector.broadcast %cst_19 : f32 to vector<2x8x8xf32>
    %63 = arith.select %61, %59, %62 : vector<2x8x8xi1>, vector<2x8x8xf32>
    %cst_20 = arith.constant dense<0xFF800000> : vector<2x8xf32>
    %64 = vector.multi_reduction <maximumf>, %63, %cst_20 [2] : vector<2x8x8xf32> to vector<2x8xf32>
    %65 = vector.shape_cast %64 : vector<2x8xf32> to vector<2x8x1xf32>
    %66 = vector.broadcast %65 : vector<2x8x1xf32> to vector<2x8x8xf32>
    %67 = arith.subf %63, %66 : vector<2x8x8xf32>
    %68 = math.exp %67 : vector<2x8x8xf32>
    %cst_21 = arith.constant dense<0.000000e+00> : vector<2x8xf32>
    %69 = vector.multi_reduction <add>, %68, %cst_21 [2] : vector<2x8x8xf32> to vector<2x8xf32>
    %70 = vector.shape_cast %69 : vector<2x8xf32> to vector<2x8x1xf32>
    %71 = tpu.reciprocal %70 {approx = true} : vector<2x8x1xf32> -> vector<2x8x1xf32>
    %72 = vector.broadcast %71 : vector<2x8x1xf32> to vector<2x8x8xf32>
    %73 = arith.mulf %68, %72 : vector<2x8x8xf32>
    %74 = arith.truncf %73 : vector<2x8x8xf32> to vector<2x8x8xbf16>
    %75 = vector.extract_strided_slice %13 {offsets = [0, 0, 16], sizes = [2, 8, 8], strides = [1, 1, 1]} : vector<2x8x32xbf16> to vector<2x8x8xbf16>
    "tpu.trace_start"() <{level = 10 : i32, message = "bqk,bkd->bqd"}> : () -> ()
    %cst_22 = arith.constant dense<0.000000e+00> : vector<2x8x8xf32>
    %76 = tpu.matmul %74, %75, %cst_22 {dimension_numbers = #tpu.dot_dimension_numbers<[2], [1], [1], [2], [0, 0, 0, 1, 1, 2], [0], [0]>} : vector<2x8x8xbf16>, vector<2x8x8xbf16>, vector<2x8x8xf32> -> vector<2x8x8xf32>
    "tpu.trace_stop"() : () -> ()
    %77 = vector.extract_strided_slice %12 {offsets = [0, 0, 24], sizes = [2, 8, 8], strides = [1, 1, 1]} : vector<2x8x32xbf16> to vector<2x8x8xbf16>
    %78 = vector.extract_strided_slice %11 {offsets = [0, 0, 24], sizes = [2, 8, 8], strides = [1, 1, 1]} : vector<2x8x32xbf16> to vector<2x8x8xbf16>
    "tpu.trace_start"() <{level = 10 : i32, message = "bqd,bkd->bqk"}> : () -> ()
    %cst_23 = arith.constant dense<0.000000e+00> : vector<2x8x8xf32>
    %79 = tpu.matmul %77, %78, %cst_23 {dimension_numbers = #tpu.dot_dimension_numbers<[2], [2], [1], [1], [0, 0, 0, 1, 1, 1], [0], [0]>} : vector<2x8x8xbf16>, vector<2x8x8xbf16>, vector<2x8x8xf32> -> vector<2x8x8xf32>
    %cst_24 = arith.constant -1.000000e+30 : f32
    "tpu.trace_stop"() : () -> ()
    %80 = vector.shape_cast %16 : vector<8x8xi1> to vector<1x8x8xi1>
    %81 = vector.broadcast %80 : vector<1x8x8xi1> to vector<2x8x8xi1>
    %82 = vector.broadcast %cst_24 : f32 to vector<2x8x8xf32>
    %83 = arith.select %81, %79, %82 : vector<2x8x8xi1>, vector<2x8x8xf32>
    %cst_25 = arith.constant dense<0xFF800000> : vector<2x8xf32>
    %84 = vector.multi_reduction <maximumf>, %83, %cst_25 [2] : vector<2x8x8xf32> to vector<2x8xf32>
    %85 = vector.shape_cast %84 : vector<2x8xf32> to vector<2x8x1xf32>
    %86 = vector.broadcast %85 : vector<2x8x1xf32> to vector<2x8x8xf32>
    %87 = arith.subf %83, %86 : vector<2x8x8xf32>
    %88 = math.exp %87 : vector<2x8x8xf32>
    %cst_26 = arith.constant dense<0.000000e+00> : vector<2x8xf32>
    %89 = vector.multi_reduction <add>, %88, %cst_26 [2] : vector<2x8x8xf32> to vector<2x8xf32>
    %90 = vector.shape_cast %89 : vector<2x8xf32> to vector<2x8x1xf32>
    %91 = tpu.reciprocal %90 {approx = true} : vector<2x8x1xf32> -> vector<2x8x1xf32>
    %92 = vector.broadcast %91 : vector<2x8x1xf32> to vector<2x8x8xf32>
    %93 = arith.mulf %88, %92 : vector<2x8x8xf32>
    %94 = arith.truncf %93 : vector<2x8x8xf32> to vector<2x8x8xbf16>
    %95 = vector.extract_strided_slice %13 {offsets = [0, 0, 24], sizes = [2, 8, 8], strides = [1, 1, 1]} : vector<2x8x32xbf16> to vector<2x8x8xbf16>
    "tpu.trace_start"() <{level = 10 : i32, message = "bqk,bkd->bqd"}> : () -> ()
    %cst_27 = arith.constant dense<0.000000e+00> : vector<2x8x8xf32>
    %96 = tpu.matmul %94, %95, %cst_27 {dimension_numbers = #tpu.dot_dimension_numbers<[2], [1], [1], [2], [0, 0, 0, 1, 1, 2], [0], [0]>} : vector<2x8x8xbf16>, vector<2x8x8xbf16>, vector<2x8x8xf32> -> vector<2x8x8xf32>
    "tpu.trace_stop"() : () -> ()
    %97 = tpu.concatenate %36, %56, %76, %96 in 2 : vector<2x8x8xf32>, vector<2x8x8xf32>, vector<2x8x8xf32>, vector<2x8x8xf32> -> vector<2x8x32xf32>
    %98 = vector.shape_cast %97 : vector<2x8x32xf32> to vector<16x32xf32>
    %99 = arith.truncf %98 : vector<16x32xf32> to vector<16x32xbf16>
    %c0_28 = arith.constant 0 : index
    %c0_29 = arith.constant 0 : index
    %100 = vector.load %arg3[%c0_28, %c0_29] : memref<32x32xbf16, #tpu.memory_space<vmem>>, vector<32x32xbf16>
    %cst_30 = arith.constant dense<0.000000e+00> : vector<16x32xf32>
    %101 = tpu.matmul %99, %100, %cst_30 {dimension_numbers = #tpu.dot_dimension_numbers<[1], [0], [0], [1], [0, 0, 1, 1], [], []>} : vector<16x32xbf16>, vector<32x32xbf16>, vector<16x32xf32> -> vector<16x32xf32>
    %c0_31 = arith.constant 0 : index
    %c0_32 = arith.constant 0 : index
    %102 = vector.load %arg4[%c0_31, %c0_32] : memref<1x32xf32, #tpu.memory_space<vmem>>, vector<1x32xf32>
    %103 = vector.broadcast %102 : vector<1x32xf32> to vector<16x32xf32>
    %104 = arith.addf %101, %103 : vector<16x32xf32>
    %105 = vector.shape_cast %104 : vector<16x32xf32> to vector<2x8x32xf32>
    %c0_33 = arith.constant 0 : index
    %c0_34 = arith.constant 0 : index
    %c0_35 = arith.constant 0 : index
    %106 = vector.load %arg5[%c0_33, %c0_34, %c0_35] : memref<2x8x32xf32, #tpu.memory_space<vmem>>, vector<2x8x32xf32>
    tpu.vector_store %arg5[%c0_33, %c0_34, %c0_35], %105 {strides = array<i32>} : memref<2x8x32xf32, #tpu.memory_space<vmem>>, vector<2x8x32xf32>,
    return
  }
}

</mosaic_0001>

<llo_original>
// kernel: multi_head_attention.1
$region0: #{multi_head_attention.1}
  #allocation0 [shape = 'u32[]', space=smem, size = 0x4, offset = 0x4, fixed_abs, tag = 'smem constant byte address 0x4 - core index']
  #allocation1 [shape = 'u32[72,128]{1,0:T(1,128)}', space=vmem, size = 0x9000, scoped, tag = 'internal scratch']
  %s0 = inlined_call_operand.hbm [shape: f32[2,8,32], index: 0, kind: input, shape index: {}]
  %s1 = inlined_call_operand.hbm [shape: bf16[32,32], index: 1, kind: input, shape index: {}]
  %s2 = inlined_call_operand.hbm [shape: bf16[32,32], index: 2, kind: input, shape index: {}]
  %s3 = inlined_call_operand.hbm [shape: bf16[32,32], index: 3, kind: input, shape index: {}]
  %s4 = inlined_call_operand.vmem [shape: f32[1,32], index: 4, kind: input, shape index: {}]
  %s5 = inlined_call_operand.hbm [shape: f32[2,8,32], index: 5, kind: output, shape index: {}]
  %s6 = sld [smem:[#allocation0]]
  $region46: #{multi_head_attention.1} parent=0
    _
  %s8 = ssub.s32 1, %s6
  %s9 = scalar_select 0, %s8, %s6
  $region1: #{multi_head_attention.1} parent=0
    #allocation2 [shape = 'u8[8192]{0}', space=vmem, size = 0x2000, scoped, tag = 'input window, operand 0, single buffered']
    #allocation3 [shape = 's32[1]{0}', space=sflag, size = 0x4, scoped, tag = 'scoped memory for multi_head_attention.1']
    #allocation4 [shape = 's32[1]{0}', space=sflag, size = 0x4, scoped, tag = 'scoped memory for multi_head_attention.1']
    #allocation5 [shape = 'u8[8192]{0}', space=vmem, size = 0x2000, scoped, tag = 'input window, operand 1, single buffered']
    #allocation6 [shape = 's32[1]{0}', space=sflag, size = 0x4, scoped, tag = 'scoped memory for multi_head_attention.1']
    #allocation7 [shape = 'u8[8192]{0}', space=vmem, size = 0x2000, scoped, tag = 'input window, operand 2, single buffered']
    #allocation8 [shape = 'u8[8192]{0}', space=vmem, size = 0x2000, scoped, tag = 'input window, operand 3, single buffered']
    #allocation9 [shape = 's32[1]{0}', space=sflag, size = 0x4, scoped, tag = 'scoped memory for multi_head_attention.1']
    #allocation10 [shape = 'u8[8192]{0}', space=vmem, size = 0x2000, scoped, tag = 'output window, operand 0, single buffered']
    %10 = vsyncpa [#allocation3], 0
    %11 = vsyncpa [#allocation6], 0
    %12 = vsyncpa [#allocation9], 0
    %13 = vsyncpa [#allocation4], 0
    // Predicated region
    $region2: #{multi_head_attention.1} parent=1 // pred_check
      _
    $region3: #{multi_head_attention.1} parent=1 // pred_check_branch
      %15 = sbr.rel (0) target = $region5
    $region4: #{multi_head_attention.1} parent=1 // pred_region
      %17 = vsyncadd [#allocation3], 0
      %s18 = sshll.u32 %s0, 4
      %s19 = int_to_ptr.hbm [resolvable:$true] %s18
      %s20 = sshll.u32 [#allocation2], 4
      %s21 = int_to_ptr.vmem [resolvable:$true] %s20
      %26 = dma.hbm_to_vmem [thread:$0]  %s19, 256, %s21, [#allocation3], 128, 128, 8
    $region5: #{multi_head_attention.1} parent=1 // pred_fallthru
      _
    // Predicated region
    $region6: #{multi_head_attention.1} parent=1 // pred_check
      _
    $region7: #{multi_head_attention.1} parent=1 // pred_check_branch
      %28 = sbr.rel (0) target = $region9
    $region8: #{multi_head_attention.1} parent=1 // pred_region
      %30 = vsyncadd [#allocation6], 0
      %s31 = sshll.u32 %s1, 4
      %s32 = int_to_ptr.hbm [resolvable:$true] %s31
      %s33 = sshll.u32 [#allocation5], 4
      %s34 = int_to_ptr.vmem [resolvable:$true] %s33
      %39 = dma.hbm_to_vmem [thread:$0]  %s32, 256, %s34, [#allocation6], 64, 64, 4
    $region9: #{multi_head_attention.1} parent=1 // pred_fallthru
      _
    // Predicated region
    $region10: #{multi_head_attention.1} parent=1 // pred_check
      _
    $region11: #{multi_head_attention.1} parent=1 // pred_check_branch
      %41 = sbr.rel (0) target = $region13
    $region12: #{multi_head_attention.1} parent=1 // pred_region
      %43 = vsyncadd [#allocation6], 0
      %s44 = sshll.u32 %s2, 4
      %s45 = int_to_ptr.hbm [resolvable:$true] %s44
      %s46 = sshll.u32 [#allocation7], 4
      %s47 = int_to_ptr.vmem [resolvable:$true] %s46
      %52 = dma.hbm_to_vmem [thread:$0]  %s45, 256, %s47, [#allocation6], 64, 64, 4
    $region13: #{multi_head_attention.1} parent=1 // pred_fallthru
      _
    // Predicated region
    $region14: #{multi_head_attention.1} parent=1 // pred_check
      _
    $region15: #{multi_head_attention.1} parent=1 // pred_check_branch
      %54 = sbr.rel (0) target = $region17
    $region16: #{multi_head_attention.1} parent=1 // pred_region
      %56 = vsyncadd [#allocation9], 0
      %s57 = sshll.u32 %s3, 4
      %s58 = int_to_ptr.hbm [resolvable:$true] %s57
      %s59 = sshll.u32 [#allocation8], 4
      %s60 = int_to_ptr.vmem [resolvable:$true] %s59
      %65 = dma.hbm_to_vmem [thread:$0]  %s58, 256, %s60, [#allocation9], 64, 64, 4
    $region17: #{multi_head_attention.1} parent=1 // pred_fallthru
      _
    // Predicated region
    $region18: #{multi_head_attention.1} parent=1 // pred_check
      _
    $region19: #{multi_head_attention.1} parent=1 // pred_check_branch
      %67 = sbr.rel (0) target = $region21
    $region20: #{multi_head_attention.1} parent=1 // pred_region
      _
    $region21: #{multi_head_attention.1} parent=1 // pred_fallthru
      _
    // Predicated region
    $region22: #{multi_head_attention.1} parent=1 // pred_check
      _
    $region23: #{multi_head_attention.1} parent=1 // pred_check_branch
      %69 = sbr.rel (0) target = $region25
    $region24: #{multi_head_attention.1} parent=1 // pred_region
      %71 = dma.done [#allocation3], 256
    $region25: #{multi_head_attention.1} parent=1 // pred_fallthru
      _
    // Predicated region
    $region26: #{multi_head_attention.1} parent=1 // pred_check
      _
    $region27: #{multi_head_attention.1} parent=1 // pred_check_branch
      %73 = sbr.rel (0) target = $region29
    $region28: #{multi_head_attention.1} parent=1 // pred_region
      %75 = dma.done [#allocation6], 256
    $region29: #{multi_head_attention.1} parent=1 // pred_fallthru
      _
    // Predicated region
    $region30: #{multi_head_attention.1} parent=1 // pred_check
      _
    $region31: #{multi_head_attention.1} parent=1 // pred_check_branch
      %77 = sbr.rel (0) target = $region33
    $region32: #{multi_head_attention.1} parent=1 // pred_region
      %79 = dma.done [#allocation6], 256
    $region33: #{multi_head_attention.1} parent=1 // pred_fallthru
      _
    // Predicated region
    $region34: #{multi_head_attention.1} parent=1 // pred_check
      _
    $region35: #{multi_head_attention.1} parent=1 // pred_check_branch
      %81 = sbr.rel (0) target = $region37
    $region36: #{multi_head_attention.1} parent=1 // pred_region
      %83 = dma.done [#allocation9], 256
    $region37: #{multi_head_attention.1} parent=1 // pred_fallthru
      _
    %v85 = vld [vmem:[#allocation2] sm:$0xff]
    %v86 = vld [vmem:[#allocation2 + $0x8] sm:$0xff]
    %v87 = vpack.c.bf16 %v86, %v85
    %v88 = vld [vmem:[#allocation5] sm:$0xf]
    %v89 = vld [vmem:[#allocation5 + $0x4] sm:$0xf]
    %v90 = vld [vmem:[#allocation5 + $0x8] sm:$0xf]
    %v91 = vld [vmem:[#allocation5 + $0xc] sm:$0xf]
    %v96 = vunpack.c.l.b16 %v88
    %v97 = vunpack.c.l.b16 %v89
    %v98 = vunpack.c.l.b16 %v90
    %v99 = vunpack.c.l.b16 %v91
    %v100 = vpack.c.b16 %v97, %v96
    %v101 = vpack.c.b16 %v99, %v98
    %vm104 = vcmask 261120
    %v106 = vsel %vm104, %v87, 0
    %108 = vmatpush.bf16.msra.mxu0 0
    %109 = vmatpush.bf16.msra.mxu0 0
    %110 = vmatpush.bf16.msra.mxu0 0
    %111 = vmatpush.bf16.msra.mxu0 0
    %112 = vmatpush.bf16.msra.mxu0 0
    %113 = vmatpush.bf16.msra.mxu0 0
    %114 = vmatpush.bf16.msra.mxu0 %v101
    %115 = vmatpush.bf16.msra.mxu0 %v100
    %116 = vmatmul.bf16.gmra.mxu0 %v106
    %v117 = vpop.f32.mrf.mxu0
    %v118 = vadd.f32 0.0, %v117
    %v119 = vpop.f32.mrf.mxu0
    %v120 = vadd.f32 0.0, %v119
    %121 = vdwg.mxu0
    %v122 = vld [vmem:[#allocation7] sm:$0xf]
    %v123 = vld [vmem:[#allocation7 + $0x4] sm:$0xf]
    %v124 = vld [vmem:[#allocation7 + $0x8] sm:$0xf]
    %v125 = vld [vmem:[#allocation7 + $0xc] sm:$0xf]
    %v130 = vunpack.c.l.b16 %v122
    %v131 = vunpack.c.l.b16 %v123
    %v132 = vunpack.c.l.b16 %v124
    %v133 = vunpack.c.l.b16 %v125
    %v134 = vpack.c.b16 %v131, %v130
    %v135 = vpack.c.b16 %v133, %v132
    %138 = vmatpush.bf16.msra.mxu0 0
    %139 = vmatpush.bf16.msra.mxu0 0
    %140 = vmatpush.bf16.msra.mxu0 0
    %141 = vmatpush.bf16.msra.mxu0 0
    %142 = vmatpush.bf16.msra.mxu0 0
    %143 = vmatpush.bf16.msra.mxu0 0
    %144 = vmatpush.bf16.msra.mxu0 %v135
    %145 = vmatpush.bf16.msra.mxu0 %v134
    %146 = vmatmul.bf16.gmra.mxu0 %v106
    %v147 = vpop.f32.mrf.mxu0
    %v148 = vadd.f32 0.0, %v147
    %v149 = vpop.f32.mrf.mxu0
    %v150 = vadd.f32 0.0, %v149
    %151 = vdwg.mxu0
    %v152 = vmul.f32 %v118, 3.0517578e-05
    %v153 = vmul.f32 %v120, 3.0517578e-05
    %v154 = vpack.c.bf16 %v118, %v118
    %v155 = vpack.c.bf16 %v120, %v120
    %v156 = vpack.c.bf16 %v152, %v152
    %v157 = vpack.c.bf16 %v153, %v153
    %v158 = vpack.c.bf16 %v148, %v148
    %v159 = vpack.c.bf16 %v150, %v150
    %v160 = vlaneseq
    %v161 = vshrl.u32 %v160, 7
    %v162 = vlaneseq
    %v163 = vand.u32 %v162, 127
    %vm164 = vcmp.le.s32.totalorder %v163, %v161
    %vm165 = vcmask 64512
    %v167 = vsel %vm165, %v156, 0
    %v170 = vsel %vm165, %v154, 0
    %172 = vmatpush.bf16.xpose.msra.mxu0 0
    %173 = vmatpush.bf16.xpose.msra.mxu0 0
    %174 = vmatpush.bf16.xpose.msra.mxu0 0
    %175 = vmatpush.bf16.xpose.msra.mxu0 0
    %176 = vmatpush.bf16.xpose.msra.mxu0 0
    %177 = vmatpush.bf16.xpose.msra.mxu0 0
    %178 = vmatpush.bf16.xpose.msra.mxu0 0
    %179 = vmatpush.bf16.xpose.msra.mxu0 %v170
    %180 = vmatmul.bf16.gmra.mxu0 %v167
    %v181 = vpop.f32.mrf.mxu0
    %v182 = vadd.f32 0.0, %v181
    %v183 = vpop.f32.mrf.mxu0
    %184 = vdwg.mxu0
    %v186 = vsel %vm165, %v157, 0
    %v189 = vsel %vm165, %v155, 0
    %191 = vmatpush.bf16.xpose.msra.mxu0 0
    %192 = vmatpush.bf16.xpose.msra.mxu0 0
    %193 = vmatpush.bf16.xpose.msra.mxu0 0
    %194 = vmatpush.bf16.xpose.msra.mxu0 0
    %195 = vmatpush.bf16.xpose.msra.mxu0 0
    %196 = vmatpush.bf16.xpose.msra.mxu0 0
    %197 = vmatpush.bf16.xpose.msra.mxu0 0
    %198 = vmatpush.bf16.xpose.msra.mxu0 %v189
    %199 = vmatmul.bf16.gmra.mxu0 %v186
    %v200 = vpop.f32.mrf.mxu0
    %v201 = vadd.f32 0.0, %v200
    %v202 = vpop.f32.mrf.mxu0
    %203 = vdwg.mxu0
    %v204 = vsel %vm164, 1, 0
    %vm205 = vcmp.eq.s32.totalorder %v204, 1
    %v206 = vsel %vm205, %v182, -1e+30
    %v207 = vsel %vm205, %v201, -1e+30
    %v208 = vsel %vm165, %v206, -inf
    %209 = vmax.xlane.f32.xlu0 %v208
    %v210 = vpop.xlane.xlu0 %209
    %v211 = vsel %vm165, %v207, -inf
    %212 = vmax.xlane.f32.xlu0 %v211
    %v213 = vpop.xlane.xlu0 %212
    %v214 = vsub.f32 %v206, %v210
    %v215 = vsub.f32 %v207, %v213
    %v216 = vmul.f32 %v214, 1.442695
    %v217 = vpow.pop %v216
    %v218 = vmul.f32 %v215, 1.442695
    %v219 = vpow.pop %v218
    %v220 = vsel %vm165, %v217, 0.0
    %221 = vadd.xlane.f32.xlu0 %v220
    %v222 = vpop.xlane.xlu0 %221
    %v223 = vsel %vm165, %v219, 0.0
    %224 = vadd.xlane.f32.xlu0 %v223
    %v225 = vpop.xlane.xlu0 %224
    %v226 = vrcp.pop %v222
    %v227 = vrcp.pop %v225
    %v228 = vmul.f32 %v217, %v226
    %v229 = vmul.f32 %v219, %v227
    %v230 = vpack.c.bf16 %v228, %v228
    %v231 = vpack.c.bf16 %v229, %v229
    %v233 = vsel %vm165, %v230, 0
    %vm235 = vcmask 1043456
    %v237 = vsel %vm235, %v158, 0
    %239 = vmatpush.bf16.msra.mxu0 0
    %240 = vmatpush.bf16.msra.mxu0 0
    %241 = vmatpush.bf16.msra.mxu0 0
    %242 = vmatpush.bf16.msra.mxu0 0
    %243 = vmatpush.bf16.msra.mxu0 0
    %244 = vmatpush.bf16.msra.mxu0 0
    %245 = vmatpush.bf16.msra.mxu0 0
    %246 = vmatpush.bf16.msra.mxu0 %v237
    %247 = vmatmul.bf16.gmra.mxu0 %v233
    %v248 = vpop.f32.mrf.mxu0
    %v249 = vadd.f32 0.0, %v248
    %v250 = vpop.f32.mrf.mxu0
    %251 = vdwg.mxu0
    %v253 = vsel %vm165, %v231, 0
    %v256 = vsel %vm235, %v159, 0
    %258 = vmatpush.bf16.msra.mxu0 0
    %259 = vmatpush.bf16.msra.mxu0 0
    %260 = vmatpush.bf16.msra.mxu0 0
    %261 = vmatpush.bf16.msra.mxu0 0
    %262 = vmatpush.bf16.msra.mxu0 0
    %263 = vmatpush.bf16.msra.mxu0 0
    %264 = vmatpush.bf16.msra.mxu0 0
    %265 = vmatpush.bf16.msra.mxu0 %v256
    %266 = vmatmul.bf16.gmra.mxu0 %v253
    %v267 = vpop.f32.mrf.mxu0
    %v268 = vadd.f32 0.0, %v267
    %v269 = vpop.f32.mrf.mxu0
    %270 = vdwg.mxu0
    %v272 = vunpack.c.l.b16 %v156
    %v273 = vpack.c.b16 %v272, %v272
    %274 = vrot.lane.b32.xlu0 %v273, 120
    %v275 = vpop.permute.xlu0 %274
    %v277 = vunpack.c.l.b16 %v154
    %v278 = vpack.c.b16 %v277, %v277
    %279 = vrot.lane.b32.xlu0 %v278, 120
    %v280 = vpop.permute.xlu0 %279
    %v282 = vsel %vm165, %v275, 0
    %v285 = vsel %vm165, %v280, 0
    %287 = vmatpush.bf16.xpose.msra.mxu0 0
    %288 = vmatpush.bf16.xpose.msra.mxu0 0
    %289 = vmatpush.bf16.xpose.msra.mxu0 0
    %290 = vmatpush.bf16.xpose.msra.mxu0 0
    %291 = vmatpush.bf16.xpose.msra.mxu0 0
    %292 = vmatpush.bf16.xpose.msra.mxu0 0
    %293 = vmatpush.bf16.xpose.msra.mxu0 0
    %294 = vmatpush.bf16.xpose.msra.mxu0 %v285
    %295 = vmatmul.bf16.gmra.mxu0 %v282
    %v296 = vpop.f32.mrf.mxu0
    %v297 = vadd.f32 0.0, %v296
    %v298 = vpop.f32.mrf.mxu0
    %299 = vdwg.mxu0
    %v301 = vunpack.c.l.b16 %v157
    %v302 = vpack.c.b16 %v301, %v301
    %303 = vrot.lane.b32.xlu0 %v302, 120
    %v304 = vpop.permute.xlu0 %303
    %v306 = vunpack.c.l.b16 %v155
    %v307 = vpack.c.b16 %v306, %v306
    %308 = vrot.lane.b32.xlu0 %v307, 120
    %v309 = vpop.permute.xlu0 %308
    %v311 = vsel %vm165, %v304, 0
    %v314 = vsel %vm165, %v309, 0
    %316 = vmatpush.bf16.xpose.msra.mxu0 0
    %317 = vmatpush.bf16.xpose.msra.mxu0 0
    %318 = vmatpush.bf16.xpose.msra.mxu0 0
    %319 = vmatpush.bf16.xpose.msra.mxu0 0
    %320 = vmatpush.bf16.xpose.msra.mxu0 0
    %321 = vmatpush.bf16.xpose.msra.mxu0 0
    %322 = vmatpush.bf16.xpose.msra.mxu0 0
    %323 = vmatpush.bf16.xpose.msra.mxu0 %v314
    %324 = vmatmul.bf16.gmra.mxu0 %v311
    %v325 = vpop.f32.mrf.mxu0
    %v326 = vadd.f32 0.0, %v325
    %v327 = vpop.f32.mrf.mxu0
    %328 = vdwg.mxu0
    %v329 = vsel %vm205, %v297, -1e+30
    %v330 = vsel %vm205, %v326, -1e+30
    %v331 = vsel %vm165, %v329, -inf
    %332 = vmax.xlane.f32.xlu0 %v331
    %v333 = vpop.xlane.xlu0 %332
    %v334 = vsel %vm165, %v330, -inf
    %335 = vmax.xlane.f32.xlu0 %v334
    %v336 = vpop.xlane.xlu0 %335
    %v337 = vsub.f32 %v329, %v333
    %v338 = vsub.f32 %v330, %v336
    %v339 = vmul.f32 %v337, 1.442695
    %v340 = vpow.pop %v339
    %v341 = vmul.f32 %v338, 1.442695
    %v342 = vpow.pop %v341
    %v343 = vsel %vm165, %v340, 0.0
    %344 = vadd.xlane.f32.xlu0 %v343
    %v345 = vpop.xlane.xlu0 %344
    %v346 = vsel %vm165, %v342, 0.0
    %347 = vadd.xlane.f32.xlu0 %v346
    %v348 = vpop.xlane.xlu0 %347
    %v349 = vrcp.pop %v345
    %v350 = vrcp.pop %v348
    %v351 = vmul.f32 %v340, %v349
    %v352 = vmul.f32 %v342, %v350
    %v353 = vpack.c.bf16 %v351, %v351
    %v354 = vpack.c.bf16 %v352, %v352
    %v356 = vunpack.c.l.b16 %v158
    %v357 = vpack.c.b16 %v356, %v356
    %358 = vrot.lane.b32.xlu0 %v357, 120
    %v359 = vpop.permute.xlu0 %358
    %v361 = vsel %vm165, %v353, 0
    %v364 = vsel %vm235, %v359, 0
    %366 = vmatpush.bf16.msra.mxu0 0
    %367 = vmatpush.bf16.msra.mxu0 0
    %368 = vmatpush.bf16.msra.mxu0 0
    %369 = vmatpush.bf16.msra.mxu0 0
    %370 = vmatpush.bf16.msra.mxu0 0
    %371 = vmatpush.bf16.msra.mxu0 0
    %372 = vmatpush.bf16.msra.mxu0 0
    %373 = vmatpush.bf16.msra.mxu0 %v364
    %374 = vmatmul.bf16.gmra.mxu0 %v361
    %v375 = vpop.f32.mrf.mxu0
    %v376 = vadd.f32 0.0, %v375
    %v377 = vpop.f32.mrf.mxu0
    %378 = vdwg.mxu0
    %v380 = vunpack.c.l.b16 %v159
    %v381 = vpack.c.b16 %v380, %v380
    %382 = vrot.lane.b32.xlu0 %v381, 120
    %v383 = vpop.permute.xlu0 %382
    %v385 = vsel %vm165, %v354, 0
    %v388 = vsel %vm235, %v383, 0
    %390 = vmatpush.bf16.msra.mxu0 0
    %391 = vmatpush.bf16.msra.mxu0 0
    %392 = vmatpush.bf16.msra.mxu0 0
    %393 = vmatpush.bf16.msra.mxu0 0
    %394 = vmatpush.bf16.msra.mxu0 0
    %395 = vmatpush.bf16.msra.mxu0 0
    %396 = vmatpush.bf16.msra.mxu0 0
    %397 = vmatpush.bf16.msra.mxu0 %v388
    %398 = vmatmul.bf16.gmra.mxu0 %v385
    %v399 = vpop.f32.mrf.mxu0
    %v400 = vadd.f32 0.0, %v399
    %v401 = vpop.f32.mrf.mxu0
    %402 = vdwg.mxu0
    %403 = vrot.lane.b32.xlu0 %v273, 112
    %v404 = vpop.permute.xlu0 %403
    %405 = vrot.lane.b32.xlu0 %v278, 112
    %v406 = vpop.permute.xlu0 %405
    %v408 = vsel %vm165, %v404, 0
    %v411 = vsel %vm165, %v406, 0
    %413 = vmatpush.bf16.xpose.msra.mxu0 0
    %414 = vmatpush.bf16.xpose.msra.mxu0 0
    %415 = vmatpush.bf16.xpose.msra.mxu0 0
    %416 = vmatpush.bf16.xpose.msra.mxu0 0
    %417 = vmatpush.bf16.xpose.msra.mxu0 0
    %418 = vmatpush.bf16.xpose.msra.mxu0 0
    %419 = vmatpush.bf16.xpose.msra.mxu0 0
    %420 = vmatpush.bf16.xpose.msra.mxu0 %v411
    %421 = vmatmul.bf16.gmra.mxu0 %v408
    %v422 = vpop.f32.mrf.mxu0
    %v423 = vadd.f32 0.0, %v422
    %v424 = vpop.f32.mrf.mxu0
    %425 = vdwg.mxu0
    %426 = vrot.lane.b32.xlu0 %v302, 112
    %v427 = vpop.permute.xlu0 %426
    %428 = vrot.lane.b32.xlu0 %v307, 112
    %v429 = vpop.permute.xlu0 %428
    %v431 = vsel %vm165, %v427, 0
    %v434 = vsel %vm165, %v429, 0
    %436 = vmatpush.bf16.xpose.msra.mxu0 0
    %437 = vmatpush.bf16.xpose.msra.mxu0 0
    %438 = vmatpush.bf16.xpose.msra.mxu0 0
    %439 = vmatpush.bf16.xpose.msra.mxu0 0
    %440 = vmatpush.bf16.xpose.msra.mxu0 0
    %441 = vmatpush.bf16.xpose.msra.mxu0 0
    %442 = vmatpush.bf16.xpose.msra.mxu0 0
    %443 = vmatpush.bf16.xpose.msra.mxu0 %v434
    %444 = vmatmul.bf16.gmra.mxu0 %v431
    %v445 = vpop.f32.mrf.mxu0
    %v446 = vadd.f32 0.0, %v445
    %v447 = vpop.f32.mrf.mxu0
    %448 = vdwg.mxu0
    %v449 = vsel %vm205, %v423, -1e+30
    %v450 = vsel %vm205, %v446, -1e+30
    %v451 = vsel %vm165, %v449, -inf
    %452 = vmax.xlane.f32.xlu0 %v451
    %v453 = vpop.xlane.xlu0 %452
    %v454 = vsel %vm165, %v450, -inf
    %455 = vmax.xlane.f32.xlu0 %v454
    %v456 = vpop.xlane.xlu0 %455
    %v457 = vsub.f32 %v449, %v453
    %v458 = vsub.f32 %v450, %v456
    %v459 = vmul.f32 %v457, 1.442695
    %v460 = vpow.pop %v459
    %v461 = vmul.f32 %v458, 1.442695
    %v462 = vpow.pop %v461
    %v463 = vsel %vm165, %v460, 0.0
    %464 = vadd.xlane.f32.xlu0 %v463
    %v465 = vpop.xlane.xlu0 %464
    %v466 = vsel %vm165, %v462, 0.0
    %467 = vadd.xlane.f32.xlu0 %v466
    %v468 = vpop.xlane.xlu0 %467
    %v469 = vrcp.pop %v465
    %v470 = vrcp.pop %v468
    %v471 = vmul.f32 %v460, %v469
    %v472 = vmul.f32 %v462, %v470
    %v473 = vpack.c.bf16 %v471, %v471
    %v474 = vpack.c.bf16 %v472, %v472
    %475 = vrot.lane.b32.xlu0 %v357, 112
    %v476 = vpop.permute.xlu0 %475
    %v478 = vsel %vm165, %v473, 0
    %v481 = vsel %vm235, %v476, 0
    %483 = vmatpush.bf16.msra.mxu0 0
    %484 = vmatpush.bf16.msra.mxu0 0
    %485 = vmatpush.bf16.msra.mxu0 0
    %486 = vmatpush.bf16.msra.mxu0 0
    %487 = vmatpush.bf16.msra.mxu0 0
    %488 = vmatpush.bf16.msra.mxu0 0
    %489 = vmatpush.bf16.msra.mxu0 0
    %490 = vmatpush.bf16.msra.mxu0 %v481
    %491 = vmatmul.bf16.gmra.mxu0 %v478
    %v492 = vpop.f32.mrf.mxu0
    %v493 = vadd.f32 0.0, %v492
    %v494 = vpop.f32.mrf.mxu0
    %495 = vdwg.mxu0
    %496 = vrot.lane.b32.xlu0 %v381, 112
    %v497 = vpop.permute.xlu0 %496
    %v499 = vsel %vm165, %v474, 0
    %v502 = vsel %vm235, %v497, 0
    %504 = vmatpush.bf16.msra.mxu0 0
    %505 = vmatpush.bf16.msra.mxu0 0
    %506 = vmatpush.bf16.msra.mxu0 0
    %507 = vmatpush.bf16.msra.mxu0 0
    %508 = vmatpush.bf16.msra.mxu0 0
    %509 = vmatpush.bf16.msra.mxu0 0
    %510 = vmatpush.bf16.msra.mxu0 0
    %511 = vmatpush.bf16.msra.mxu0 %v502
    %512 = vmatmul.bf16.gmra.mxu0 %v499
    %v513 = vpop.f32.mrf.mxu0
    %v514 = vadd.f32 0.0, %v513
    %v515 = vpop.f32.mrf.mxu0
    %516 = vdwg.mxu0
    %517 = vrot.lane.b32.xlu0 %v273, 104
    %v518 = vpop.permute.xlu0 %517
    %519 = vrot.lane.b32.xlu0 %v278, 104
    %v520 = vpop.permute.xlu0 %519
    %v522 = vsel %vm165, %v518, 0
    %v525 = vsel %vm165, %v520, 0
    %527 = vmatpush.bf16.xpose.msra.mxu0 0
    %528 = vmatpush.bf16.xpose.msra.mxu0 0
    %529 = vmatpush.bf16.xpose.msra.mxu0 0
    %530 = vmatpush.bf16.xpose.msra.mxu0 0
    %531 = vmatpush.bf16.xpose.msra.mxu0 0
    %532 = vmatpush.bf16.xpose.msra.mxu0 0
    %533 = vmatpush.bf16.xpose.msra.mxu0 0
    %534 = vmatpush.bf16.xpose.msra.mxu0 %v525
    %535 = vmatmul.bf16.gmra.mxu0 %v522
    %v536 = vpop.f32.mrf.mxu0
    %v537 = vadd.f32 0.0, %v536
    %v538 = vpop.f32.mrf.mxu0
    %539 = vdwg.mxu0
    %540 = vrot.lane.b32.xlu0 %v302, 104
    %v541 = vpop.permute.xlu0 %540
    %542 = vrot.lane.b32.xlu0 %v307, 104
    %v543 = vpop.permute.xlu0 %542
    %v545 = vsel %vm165, %v541, 0
    %v548 = vsel %vm165, %v543, 0
    %550 = vmatpush.bf16.xpose.msra.mxu0 0
    %551 = vmatpush.bf16.xpose.msra.mxu0 0
    %552 = vmatpush.bf16.xpose.msra.mxu0 0
    %553 = vmatpush.bf16.xpose.msra.mxu0 0
    %554 = vmatpush.bf16.xpose.msra.mxu0 0
    %555 = vmatpush.bf16.xpose.msra.mxu0 0
    %556 = vmatpush.bf16.xpose.msra.mxu0 0
    %557 = vmatpush.bf16.xpose.msra.mxu0 %v548
    %558 = vmatmul.bf16.gmra.mxu0 %v545
    %v559 = vpop.f32.mrf.mxu0
    %v560 = vadd.f32 0.0, %v559
    %v561 = vpop.f32.mrf.mxu0
    %562 = vdwg.mxu0
    %v563 = vsel %vm205, %v537, -1e+30
    %v564 = vsel %vm205, %v560, -1e+30
    %v565 = vsel %vm165, %v563, -inf
    %566 = vmax.xlane.f32.xlu0 %v565
    %v567 = vpop.xlane.xlu0 %566
    %v568 = vsel %vm165, %v564, -inf
    %569 = vmax.xlane.f32.xlu0 %v568
    %v570 = vpop.xlane.xlu0 %569
    %v571 = vsub.f32 %v563, %v567
    %v572 = vsub.f32 %v564, %v570
    %v573 = vmul.f32 %v571, 1.442695
    %v574 = vpow.pop %v573
    %v575 = vmul.f32 %v572, 1.442695
    %v576 = vpow.pop %v575
    %v577 = vsel %vm165, %v574, 0.0
    %578 = vadd.xlane.f32.xlu0 %v577
    %v579 = vpop.xlane.xlu0 %578
    %v580 = vsel %vm165, %v576, 0.0
    %581 = vadd.xlane.f32.xlu0 %v580
    %v582 = vpop.xlane.xlu0 %581
    %v583 = vrcp.pop %v579
    %v584 = vrcp.pop %v582
    %v585 = vmul.f32 %v574, %v583
    %v586 = vmul.f32 %v576, %v584
    %v587 = vpack.c.bf16 %v585, %v585
    %v588 = vpack.c.bf16 %v586, %v586
    %589 = vrot.lane.b32.xlu0 %v357, 104
    %v590 = vpop.permute.xlu0 %589
    %v592 = vsel %vm165, %v587, 0
    %v595 = vsel %vm235, %v590, 0
    %597 = vmatpush.bf16.msra.mxu0 0
    %598 = vmatpush.bf16.msra.mxu0 0
    %599 = vmatpush.bf16.msra.mxu0 0
    %600 = vmatpush.bf16.msra.mxu0 0
    %601 = vmatpush.bf16.msra.mxu0 0
    %602 = vmatpush.bf16.msra.mxu0 0
    %603 = vmatpush.bf16.msra.mxu0 0
    %604 = vmatpush.bf16.msra.mxu0 %v595
    %605 = vmatmul.bf16.gmra.mxu0 %v592
    %v606 = vpop.f32.mrf.mxu0
    %v607 = vadd.f32 0.0, %v606
    %v608 = vpop.f32.mrf.mxu0
    %609 = vdwg.mxu0
    %610 = vrot.lane.b32.xlu0 %v381, 104
    %v611 = vpop.permute.xlu0 %610
    %v613 = vsel %vm165, %v588, 0
    %v616 = vsel %vm235, %v611, 0
    %618 = vmatpush.bf16.msra.mxu0 0
    %619 = vmatpush.bf16.msra.mxu0 0
    %620 = vmatpush.bf16.msra.mxu0 0
    %621 = vmatpush.bf16.msra.mxu0 0
    %622 = vmatpush.bf16.msra.mxu0 0
    %623 = vmatpush.bf16.msra.mxu0 0
    %624 = vmatpush.bf16.msra.mxu0 0
    %625 = vmatpush.bf16.msra.mxu0 %v616
    %626 = vmatmul.bf16.gmra.mxu0 %v613
    %v627 = vpop.f32.mrf.mxu0
    %v628 = vadd.f32 0.0, %v627
    %v629 = vpop.f32.mrf.mxu0
    %630 = vdwg.mxu0
    %633 = vrot.lane.b32.xlu0 %v376, 8
    %v634 = vpop.permute.xlu0 %633
    %635 = vrot.lane.b32.xlu0 %v400, 8
    %v636 = vpop.permute.xlu0 %635
    %641 = vrot.lane.b32.xlu0 %v493, 16
    %v642 = vpop.permute.xlu0 %641
    %643 = vrot.lane.b32.xlu0 %v514, 16
    %v644 = vpop.permute.xlu0 %643
    %649 = vrot.lane.b32.xlu0 %v607, 24
    %v650 = vpop.permute.xlu0 %649
    %651 = vrot.lane.b32.xlu0 %v628, 24
    %v652 = vpop.permute.xlu0 %651
    %v655 = vsel %vm165, %v249, %v634
    %v656 = vsel %vm165, %v268, %v636
    %vm657 = vcmask 130048
    %v658 = vsel %vm657, %v655, %v642
    %v659 = vsel %vm657, %v656, %v644
    %vm660 = vcmask 195584
    %v661 = vsel %vm660, %v658, %v650
    %v662 = vsel %vm660, %v659, %v652
    %v663 = vpack.c.bf16 %v662, %v661
    %v664 = vld [vmem:[#allocation8] sm:$0xf]
    %v665 = vld [vmem:[#allocation8 + $0x4] sm:$0xf]
    %v666 = vld [vmem:[#allocation8 + $0x8] sm:$0xf]
    %v667 = vld [vmem:[#allocation8 + $0xc] sm:$0xf]
    %v668 = vld [vmem:[%s4] sm:$0x1]
    %v670 = vperm.slane %v668, 0
    %v676 = vunpack.c.l.b16 %v664
    %v677 = vunpack.c.l.b16 %v665
    %v678 = vunpack.c.l.b16 %v666
    %v679 = vunpack.c.l.b16 %v667
    %v680 = vpack.c.b16 %v677, %v676
    %v681 = vpack.c.b16 %v679, %v678
    %v685 = vsel %vm104, %v663, 0
    %687 = vmatpush.bf16.msra.mxu0 0
    %688 = vmatpush.bf16.msra.mxu0 0
    %689 = vmatpush.bf16.msra.mxu0 0
    %690 = vmatpush.bf16.msra.mxu0 0
    %691 = vmatpush.bf16.msra.mxu0 0
    %692 = vmatpush.bf16.msra.mxu0 0
    %693 = vmatpush.bf16.msra.mxu0 %v681
    %694 = vmatpush.bf16.msra.mxu0 %v680
    %695 = vmatmul.bf16.gmra.mxu0 %v685
    %v696 = vpop.f32.mrf.mxu0
    %v697 = vadd.f32 %v670, %v696
    %v698 = vpop.f32.mrf.mxu0
    %v699 = vadd.f32 %v670, %v698
    %700 = vdwg.mxu0
    %701 = vst.msk [vmem:[#allocation10] sm:$0xff] %vm104, %v697
    %702 = vst.msk [vmem:[#allocation10 + $0x8] sm:$0xff] %vm104, %v699
    // Predicated region
    $region38: #{multi_head_attention.1} parent=1 // pred_check
      _
    $region39: #{multi_head_attention.1} parent=1 // pred_check_branch
      %704 = sbr.rel (0) target = $region41
    $region40: #{multi_head_attention.1} parent=1 // pred_region
      %706 = vsyncadd [#allocation4], 0
      %s707 = sshll.u32 [#allocation10], 4
      %s708 = int_to_ptr.vmem [resolvable:$true] %s707
      %s709 = sshll.u32 %s5, 4
      %s710 = int_to_ptr.hbm [resolvable:$true] %s709
      %715 = dma.vmem_to_hbm [thread:$0]  %s708, 256, %s710, [#allocation4], 128, 128, 8
    $region41: #{multi_head_attention.1} parent=1 // pred_fallthru
      _
    // Predicated region
    $region42: #{multi_head_attention.1} parent=1 // pred_check
      _
    $region43: #{multi_head_attention.1} parent=1 // pred_check_branch
      %717 = sbr.rel (0) target = $region45
    $region44: #{multi_head_attention.1} parent=1 // pred_region
      %719 = dma.done [#allocation4], 256
    $region45: #{multi_head_attention.1} parent=1 // pred_fallthru
      _
    %720 = vsyncpa [#allocation3], 1
    %721 = vsyncpa [#allocation6], 1
    %722 = vsyncpa [#allocation9], 1
    %723 = vsyncpa [#allocation4], 1

</llo_original>
